<compile_context>
chip_gen: v7x
topology: tpu7x:2x2x1
jax: 0.10.0
libtpu: 0.0.40
codegen_flags: <defaults>
</compile_context>

<pallas_src>
import functools
import math
import numpy as np
import jax
import jax.numpy as jnp
from jax.experimental import pallas as pl
from jax.experimental.pallas import tpu as pltpu

LANES = 128  # TPU lane width; output rows are packed/padded to a multiple of this


def positional_embedding_table(T, d_model):
    """Fixed sinusoidal table, identical to PositionalEmbedding (rows [0, T))."""
    position = np.arange(T, dtype=np.float32)[:, None]
    div_term = np.exp(
        np.arange(0, d_model, 2, dtype=np.float32) * -(math.log(10000.0) / d_model)
    )
    pe = np.zeros((T, d_model), dtype=np.float32)
    pe[:, 0::2] = np.sin(position * div_term)
    pe[:, 1::2] = np.cos(position * div_term)
    return jnp.asarray(pe)


def _round_up(x, m):
    return ((x + m - 1) // m) * m


def data_embedding_kernel(f_ref, w_ref, pe_ref, o_ref):
    # f_ref : (tile_t, pack*Kf)     packed features [x[t-1], x[t], x[t+1], x_mark[t]] x pack
    # w_ref : (pack*Kf, out_lanes)  block-diagonal combined conv+linear weight
    # pe_ref: (tile_t, out_lanes)   packed positional embedding
    # o_ref : (tile_t, out_lanes)   packed output (pack timesteps per lane-dense row)
    o_ref[...] = (
        jnp.dot(f_ref[...], w_ref[...], preferred_element_type=jnp.float32)
        + pe_ref[...]
    )


@functools.partial(jax.jit, static_argnames=("max_tile_t",))
def data_embedding(x, x_mark, w_conv, w_time, pe, *, max_tile_t=1024):
    """Fused DataEmbedding forward (eval mode).

    x      : (B, T, c_in)   float32
    x_mark : (B, T, d_mark) float32 time features (freq='h' -> 4)
    w_conv : (d_model, c_in, 3)  Conv1d weight (circular padding, no bias)
    w_time : (d_model, d_mark)   Linear weight (no bias)
    pe     : (>=T, d_model)      sinusoidal positional table
    returns: (B, T, d_model) float32
    """
    B, T, c_in = x.shape
    d_model = w_conv.shape[0]
    d_mark = x_mark.shape[-1]
    assert w_time.shape == (d_model, d_mark)
    Kf = 3 * c_in + d_mark

    # Lane packing strategy.
    if d_model < LANES and LANES % d_model == 0:
        pack, d_pad = LANES // d_model, d_model          # pack timesteps per 128-lane row
    else:
        pack, d_pad = 1, _round_up(d_model, LANES)       # pad channels to lane multiple
    out_lanes = pack * d_pad
    kdim = pack * Kf

    # --- circular conv as shifted copies + time features -> one feature matrix ---
    x = x.astype(jnp.float32)
    x_mark = x_mark.astype(jnp.float32)
    x_prev = jnp.roll(x, 1, axis=1)    # x[(t-1) mod T]
    x_next = jnp.roll(x, -1, axis=1)   # x[(t+1) mod T]
    feats = jnp.concatenate([x_prev, x, x_next, x_mark], axis=-1)        # (B, T, Kf)

    # --- pack `pack` consecutive timesteps per row ---
    T_round = _round_up(T, pack)
    pe_full = pe[:T].astype(jnp.float32)
    if d_pad != d_model:
        pe_full = jnp.pad(pe_full, ((0, 0), (0, d_pad - d_model)))
    if T_round != T:
        feats = jnp.pad(feats, ((0, 0), (0, T_round - T), (0, 0)))
        pe_full = jnp.pad(pe_full, ((0, T_round - T), (0, 0)))
    T_pk = T_round // pack
    feats_p = feats.reshape(B, T_pk, kdim)
    pe_p = pe_full.reshape(T_pk, out_lanes)

    # --- combined (conv taps + linear) weight, block-diagonal for lane packing ---
    w_comb = jnp.concatenate(
        [w_conv[:, :, 0].T, w_conv[:, :, 1].T, w_conv[:, :, 2].T, w_time.T], axis=0
    ).astype(jnp.float32)                                                # (Kf, d_model)
    if d_pad != d_model:
        w_comb = jnp.pad(w_comb, ((0, 0), (0, d_pad - d_model)))
    w_bd = jnp.kron(jnp.eye(pack, dtype=jnp.float32), w_comb)           # (kdim, out_lanes)

    # --- tile the packed-time axis: big tiles, multiple of 8 sublanes ---
    n_tiles = pl.cdiv(T_pk, max_tile_t)
    tile_t = _round_up(pl.cdiv(T_pk, n_tiles), 8)
    T_pad = n_tiles * tile_t
    if T_pad != T_pk:
        feats_p = jnp.pad(feats_p, ((0, 0), (0, T_pad - T_pk), (0, 0)))
        pe_p = jnp.pad(pe_p, ((0, T_pad - T_pk), (0, 0)))

    grid = (T_pad // tile_t, B)   # batch innermost: pe / weight blocks are not re-fetched

    out = pl.pallas_call(
        data_embedding_kernel,
        out_shape=jax.ShapeDtypeStruct((B, T_pad, out_lanes), jnp.float32),
        grid_spec=pltpu.PrefetchScalarGridSpec(
            num_scalar_prefetch=0,
            grid=grid,
            in_specs=[
                pl.BlockSpec((None, tile_t, kdim), lambda t, b: (b, t, 0)),
                pl.BlockSpec((kdim, out_lanes), lambda t, b: (0, 0)),
                pl.BlockSpec((tile_t, out_lanes), lambda t, b: (t, 0)),
            ],
            out_specs=pl.BlockSpec((None, tile_t, out_lanes), lambda t, b: (b, t, 0)),
        ),
        compiler_params=pltpu.CompilerParams(
            dimension_semantics=("parallel", "parallel")),
    )(feats_p, w_bd, pe_p)

    out = out[:, :T_pk, :].reshape(B, T_round, d_pad)[:, :T, :d_model]
    return out


def data_embedding_ref(x, x_mark, w_conv, w_time, pe):
    """Pure-JAX reference mirroring the PyTorch DataEmbedding forward (eval mode)."""
    B, T, _ = x.shape
    xc = jnp.transpose(x, (0, 2, 1))                                      # (B, c_in, T)
    xc = jnp.concatenate([xc[:, :, -1:], xc, xc[:, :, :1]], axis=-1)      # circular pad 1
    val = jax.lax.conv_general_dilated(
        xc, w_conv, window_strides=(1,), padding="VALID",
        dimension_numbers=("NCH", "OIH", "NCH"),
        precision=jax.lax.Precision.HIGHEST)                              # (B, d_model, T)
    val = jnp.transpose(val, (0, 2, 1))
    temp = jnp.einsum("btf,df->btd", x_mark, w_time,
                      precision=jax.lax.Precision.HIGHEST)
    return val + temp + pe[None, :T, :]


if __name__ == "__main__":
    key = jax.random.PRNGKey(0)
    B, T, C_IN, D_MODEL, D_MARK = 2, 8, 4, 32, 4   # freq='h' -> 4 time features
    k1, k2, k3, k4 = jax.random.split(key, 4)

    x = jax.random.normal(k1, (B, T, C_IN), jnp.float32)
    x_mark = jax.random.normal(k2, (B, T, D_MARK), jnp.float32)
    w_conv = jax.random.normal(k3, (D_MODEL, C_IN, 3), jnp.float32) / math.sqrt(3 * C_IN)
    w_time = jax.random.normal(k4, (D_MODEL, D_MARK), jnp.float32) / math.sqrt(D_MARK)
    pe = positional_embedding_table(T, D_MODEL)

    y = data_embedding(x, x_mark, w_conv, w_time, pe)
    y = jax.block_until_ready(y)

    y_ref = data_embedding_ref(x, x_mark, w_conv, w_time, pe)
    np.testing.assert_allclose(np.asarray(y), np.asarray(y_ref), rtol=1e-3, atol=1e-3)

    assert y.shape == (B, T, D_MODEL) and y.dtype == jnp.float32
    print("KERNEL_OK")
</pallas_src>

<mosaic_0001>
module attributes {stable_mosaic.version = 11 : i64} {
  func.func @data_embedding_kernel(%arg0: i32, %arg1: i32, %arg2: memref<1x8x64xf32, #tpu.memory_space<vmem>>, %arg3: memref<64x128xf32, #tpu.memory_space<vmem>>, %arg4: memref<8x128xf32, #tpu.memory_space<vmem>>, %arg5: memref<1x8x128xf32, #tpu.memory_space<vmem>>) attributes {dimension_semantics = [#tpu.dimension_semantics<parallel>, #tpu.dimension_semantics<parallel>], iteration_bounds = array<i64: 1, 2>, scalar_prefetch = 0 : i64, scratch_operands = 0 : i64, tpu.core_type = #tpu.core_type<tc>, window_params = [{transform_indices = @transform_0, window_bounds = array<i64: 1, 8, 64>}, {pipeline_mode = #tpu.pipeline_mode<synchronous>, transform_indices = @transform_1, window_bounds = array<i64: 64, 128>}, {transform_indices = @transform_2, window_bounds = array<i64: 8, 128>}, {transform_indices = @transform_3, window_bounds = array<i64: 1, 8, 128>}]} {
    %c0 = arith.constant 0 : index
    %c0_0 = arith.constant 0 : index
    %c0_1 = arith.constant 0 : index
    %0 = vector.load %arg2[%c0, %c0_0, %c0_1] : memref<1x8x64xf32, #tpu.memory_space<vmem>>, vector<1x8x64xf32>
    %1 = vector.shape_cast %0 : vector<1x8x64xf32> to vector<8x64xf32>
    %c0_2 = arith.constant 0 : index
    %c0_3 = arith.constant 0 : index
    %2 = vector.load %arg3[%c0_2, %c0_3] : memref<64x128xf32, #tpu.memory_space<vmem>>, vector<64x128xf32>
    %cst = arith.constant dense<0.000000e+00> : vector<8x128xf32>
    %3 = tpu.matmul %1, %2, %cst {dimension_numbers = #tpu.dot_dimension_numbers<[1], [0], [0], [1], [0, 0, 1, 1], [], []>} : vector<8x64xf32>, vector<64x128xf32>, vector<8x128xf32> -> vector<8x128xf32>
    %c0_4 = arith.constant 0 : index
    %c0_5 = arith.constant 0 : index
    %4 = vector.load %arg4[%c0_4, %c0_5] : memref<8x128xf32, #tpu.memory_space<vmem>>, vector<8x128xf32>
    %5 = arith.addf %3, %4 : vector<8x128xf32>
    %c0_6 = arith.constant 0 : index
    %c0_7 = arith.constant 0 : index
    %c0_8 = arith.constant 0 : index
    %6 = vector.load %arg5[%c0_6, %c0_7, %c0_8] : memref<1x8x128xf32, #tpu.memory_space<vmem>>, vector<1x8x128xf32>
    %7 = vector.shape_cast %6 : vector<1x8x128xf32> to vector<8x128xf32>
    %8 = vector.shape_cast %5 : vector<8x128xf32> to vector<1x8x128xf32>
    tpu.vector_store %arg5[%c0_6, %c0_7, %c0_8], %8 {strides = array<i32>} : memref<1x8x128xf32, #tpu.memory_space<vmem>>, vector<1x8x128xf32>,
    return
  }
  func.func @transform_0(%arg0: i32, %arg1: i32) -> (i32, i32, i32) {
    %c0_i32 = arith.constant 0 : i32
    %c0_i32_0 = arith.constant 0 : i32
    return %arg1, %arg0, %c0_i32 : i32, i32, i32
  }
  func.func @transform_1(%arg0: i32, %arg1: i32) -> (i32, i32) {
    %c0_i32 = arith.constant 0 : i32
    %c0_i32_0 = arith.constant 0 : i32
    %c0_i32_1 = arith.constant 0 : i32
    return %c0_i32, %c0_i32_0 : i32, i32
  }
  func.func @transform_2(%arg0: i32, %arg1: i32) -> (i32, i32) {
    %c0_i32 = arith.constant 0 : i32
    %c0_i32_0 = arith.constant 0 : i32
    return %arg0, %c0_i32 : i32, i32
  }
  func.func @transform_3(%arg0: i32, %arg1: i32) -> (i32, i32, i32) {
    %c0_i32 = arith.constant 0 : i32
    %c0_i32_0 = arith.constant 0 : i32
    return %arg1, %arg0, %c0_i32 : i32, i32, i32
  }
}

</mosaic_0001>

<llo_original>
// kernel: data_embedding.1
$region0: #{data_embedding.1}
  #allocation0 [shape = 'u32[]', space=smem, size = 0x4, offset = 0x4, fixed_abs, tag = 'smem constant byte address 0x4 - core index']
  #allocation1 [shape = 'u32[144,128]{1,0:T(1,128)}', space=vmem, size = 0x12000, scoped, tag = 'internal scratch']
  %s0 = inlined_call_operand.vmem [shape: f32[2,8,64], index: 0, kind: input, shape index: {}]
  %s1 = inlined_call_operand.vmem [shape: f32[64,128], index: 1, kind: input, shape index: {}]
  %s2 = inlined_call_operand.vmem [shape: f32[8,128], index: 2, kind: input, shape index: {}]
  %s3 = inlined_call_operand.vmem [shape: f32[2,8,128], index: 3, kind: output, shape index: {}]
  %s4 = sld [smem:[#allocation0]]
  $region45: #{data_embedding.1} parent=0
    _
  %s6 = ssub.s32 1, %s4
  %s7 = scalar_select 0, %s6, %s4
  loop: start=0, step=1, limit=4
  $region2: #{data_embedding.1} parent=0 // loop_pre_header
    _
  $region3: #{data_embedding.1} parent=0 // loop_header
    %s9 = sphi 0, %s13
    %p10 = scmp.ge.s32.totalorder %s9, 4
    %s16 = sphi 0, %s28
    %s17 = sphi 0, %s24
    %s18 = sphi 0, %s16
    %s19 = sphi 0, %s17
    %s20 = sphi 0, %s18
    %s21 = sphi 0, %s19
    %s33 = sphi 0, %s35
    %s36 = sphi 0, %s33
    %s37 = sphi 0, %s36
    %s53 = sphi 0, %s37
    %s57 = sphi 0, %s57
    %s59 = sphi 0, %s57
    %s60 = sphi 0, %s59
    %s74 = sphi 0, %s60
    %s80 = sphi 0, %s82
    %s83 = sphi 0, %s80
    %s84 = sphi 0, %s83
    %s100 = sphi 0, %s84
    %s108 = sphi 0, %s110
    %s111 = sphi 0, %s108
    %s112 = sphi 0, %s111
    %s128 = sphi 0, %s112
  $region4: #{data_embedding.1} parent=0 // loop_header_branch
    %12 = sbr.rel (%p10) target = $region8
  $region5: #{data_embedding.1} parent=0 // loop_body
    %s14 = ssub.s32 %s9, 1
    %s15 = ssub.s32 %s9, 2
    %s22 = sadd.s32 1, %s17
    %p23 = scmp.ge.s32.totalorder %s22, 2
    %s24 = scalar_select %p23, 0, %s22
    %s25 = sadd.s32 1, %s16
    %s26 = scalar_select %p23, %s25, %s16
    %p27 = scmp.ge.s32.totalorder %s26, 1
    %s28 = scalar_select %p27, 0, %s26
    %s29 = ssub.s32 %s17, %s24
    %s30 = ssub.s32 %s16, %s28
    %s31 = sor.u32 %s29, %s30
    %p32 = scmp.eq.s32.totalorder %s31, 0
    %s34 = sadd.s32 %s33, 1
    %s35 = scalar_select %p32, %s33, %s34
    %p38 = pneg %p32
    %p39 = scmp.eq.s32.totalorder %s9, 1
    %p40 = por %p38, %p39
    %p41 = scmp.ne.s32.totalorder %s33, %s36
    %p42 = scmp.eq.s32.totalorder %s9, 0
    %p43 = por %p41, %p42
    %p44 = scmp.ne.s32.totalorder %s33, %s36
    %p45 = scmp.eq.s32.totalorder %s14, 1
    %p46 = por %p44, %p45
    %p47 = scmp.ne.s32.totalorder %s36, %s37
    %p48 = scmp.eq.s32.totalorder %s14, 0
    %p49 = por %p47, %p48
    %p50 = scmp.ne.s32.totalorder %s36, %s37
    %p51 = scmp.eq.s32.totalorder %s15, 1
    %p52 = por %p50, %p51
    %p54 = scmp.ne.s32.totalorder %s37, %s53
    %p55 = scmp.eq.s32.totalorder %s15, 0
    %p56 = por %p54, %p55
    %s58 = sadd.s32 %s57, 1
    %p61 = scmp.eq.s32.totalorder %s9, 1
    %p62 = scmp.ne.s32.totalorder %s57, %s59
    %p63 = scmp.eq.s32.totalorder %s9, 0
    %p64 = por %p62, %p63
    %p65 = scmp.ne.s32.totalorder %s57, %s59
    %p66 = scmp.eq.s32.totalorder %s14, 1
    %p67 = por %p65, %p66
    %p68 = scmp.ne.s32.totalorder %s59, %s60
    %p69 = scmp.eq.s32.totalorder %s14, 0
    %p70 = por %p68, %p69
    %p71 = scmp.ne.s32.totalorder %s59, %s60
    %p72 = scmp.eq.s32.totalorder %s15, 1
    %p73 = por %p71, %p72
    %p75 = scmp.ne.s32.totalorder %s60, %s74
    %p76 = scmp.eq.s32.totalorder %s15, 0
    %p77 = por %p75, %p76
    %s78 = ssub.s32 %s16, %s28
    %p79 = scmp.eq.s32.totalorder %s78, 0
    %s81 = sadd.s32 %s80, 1
    %s82 = scalar_select %p79, %s80, %s81
    %p85 = pneg %p79
    %p86 = scmp.eq.s32.totalorder %s9, 1
    %p87 = por %p85, %p86
    %p88 = scmp.ne.s32.totalorder %s80, %s83
    %p89 = scmp.eq.s32.totalorder %s9, 0
    %p90 = por %p88, %p89
    %p91 = scmp.ne.s32.totalorder %s80, %s83
    %p92 = scmp.eq.s32.totalorder %s14, 1
    %p93 = por %p91, %p92
    %p94 = scmp.ne.s32.totalorder %s83, %s84
    %p95 = scmp.eq.s32.totalorder %s14, 0
    %p96 = por %p94, %p95
    %p97 = scmp.ne.s32.totalorder %s83, %s84
    %p98 = scmp.eq.s32.totalorder %s15, 1
    %p99 = por %p97, %p98
    %p101 = scmp.ne.s32.totalorder %s84, %s100
    %p102 = scmp.eq.s32.totalorder %s15, 0
    %p103 = por %p101, %p102
    %s104 = ssub.s32 %s17, %s24
    %s105 = ssub.s32 %s16, %s28
    %s106 = sor.u32 %s104, %s105
    %p107 = scmp.eq.s32.totalorder %s106, 0
    %s109 = sadd.s32 %s108, 1
    %s110 = scalar_select %p107, %s108, %s109
    %p113 = pneg %p107
    %p114 = scmp.eq.s32.totalorder %s9, 1
    %p115 = por %p113, %p114
    %p116 = scmp.ne.s32.totalorder %s108, %s111
    %p117 = scmp.eq.s32.totalorder %s9, 0
    %p118 = por %p116, %p117
    %p119 = scmp.ne.s32.totalorder %s108, %s111
    %p120 = scmp.eq.s32.totalorder %s14, 1
    %p121 = por %p119, %p120
    %p122 = scmp.ne.s32.totalorder %s111, %s112
    %p123 = scmp.eq.s32.totalorder %s14, 0
    %p124 = por %p122, %p123
    %p125 = scmp.ne.s32.totalorder %s111, %s112
    %p126 = scmp.eq.s32.totalorder %s15, 1
    %p127 = por %p125, %p126
    %p129 = scmp.ne.s32.totalorder %s112, %s128
    %p130 = scmp.eq.s32.totalorder %s15, 0
    %p131 = por %p129, %p130
    %p132 = scmp.le.s32.totalorder 1, %s9
    %p133 = scmp.lt.s32.totalorder %s9, 3
    %p134 = pnand %p132, %p133
    %p135 = pneg %p134
    // Predicated region
    $region9: #{data_embedding.1} parent=5 // pred_check
      _
    $region10: #{data_embedding.1} parent=5 // pred_check_branch
      %137 = sbr.rel (%p134) target = $region12
    $region11: #{data_embedding.1} parent=5 // pred_region
      %s138 = ssub.s32 %s9, 1
      // Predicated region
      $region13: #{data_embedding.1} parent=11 // pred_check
        %p139 = pneg %p70
      $region14: #{data_embedding.1} parent=11 // pred_check_branch
        %141 = sbr.rel (%p139) target = $region16
      $region15: #{data_embedding.1} parent=11 // pred_region
        _
      $region16: #{data_embedding.1} parent=11 // pred_fallthru
        _
      // Predicated region
      $region17: #{data_embedding.1} parent=11 // pred_check
        %p142 = pneg %p96
      $region18: #{data_embedding.1} parent=11 // pred_check_branch
        %144 = sbr.rel (%p142) target = $region20
      $region19: #{data_embedding.1} parent=11 // pred_region
        %p145 = scmp.lt.s32.totalorder %s18, 0
        %s146 = scalar_select %p145, %s18, 0
        %s147 = smul.addr %s146, 8
        %s148 = scalar_lea.vmem %s2, %s147
      $region20: #{data_embedding.1} parent=11 // pred_fallthru
        _
    $region12: #{data_embedding.1} parent=5 // pred_fallthru
      _
    %p149 = scmp.lt.s32.totalorder %s9, 2
    // Predicated region
    $region21: #{data_embedding.1} parent=5 // pred_check
      %p150 = pneg %p149
    $region22: #{data_embedding.1} parent=5 // pred_check_branch
      %152 = sbr.rel (%p150) target = $region24
    $region23: #{data_embedding.1} parent=5 // pred_region
      // Predicated region
      $region25: #{data_embedding.1} parent=23 // pred_check
        %p153 = pneg %p43
      $region26: #{data_embedding.1} parent=23 // pred_check_branch
        %155 = sbr.rel (%p153) target = $region28
      $region27: #{data_embedding.1} parent=23 // pred_region
        %p156 = scmp.lt.s32.totalorder %s17, 1
        %s157 = scalar_select %p156, %s17, 1
        %p158 = scmp.lt.s32.totalorder %s16, 0
        %s159 = scalar_select %p158, %s16, 0
        %s160 = sadd.s32 %s159, %s157
        %s161 = smul.addr %s160, 8
        %s162 = scalar_lea.vmem %s0, %s161
      $region28: #{data_embedding.1} parent=23 // pred_fallthru
        _
    $region24: #{data_embedding.1} parent=5 // pred_fallthru
      _
    %p163 = scmp.le.s32.totalorder 1, %s9
    %p164 = scmp.lt.s32.totalorder %s9, 3
    %p165 = pnand %p163, %p164
    %p166 = pneg %p165
    // Predicated region
    $region29: #{data_embedding.1} parent=5 // pred_check
      _
    $region30: #{data_embedding.1} parent=5 // pred_check_branch
      %168 = sbr.rel (%p165) target = $region32
    $region31: #{data_embedding.1} parent=5 // pred_region
      %s169 = ssub.s32 %s9, 1
      %p170 = scmp.lt.s32.totalorder %s19, 1
      %s171 = scalar_select %p170, %s19, 1
      %p172 = scmp.lt.s32.totalorder %s18, 0
      %s173 = scalar_select %p172, %s18, 0
      %s174 = sadd.s32 %s173, %s171
      %s175 = smul.addr %s174, 8
      %s176 = scalar_lea.vmem %s0, %s175
      %p177 = pneg %p49
      %p178 = pneg %p46
      %p179 = pneg %p70
      %p180 = pneg %p67
      %p181 = scmp.lt.s32.totalorder %s18, 0
      %s182 = scalar_select %p181, %s18, 0
      %s183 = smul.addr %s182, 8
      %s184 = scalar_lea.vmem %s2, %s183
      %p185 = pneg %p96
      %p186 = pneg %p93
      %p187 = pneg %p124
      %p188 = pneg %p121
      %p189 = scmp.lt.s32.totalorder %s19, 1
      %s190 = scalar_select %p189, %s19, 1
      %p191 = scmp.lt.s32.totalorder %s18, 0
      %s192 = scalar_select %p191, %s18, 0
      %s193 = sadd.s32 %s192, %s190
      %s194 = smul.addr %s193, 8
      %s195 = scalar_lea.vmem %s3, %s194
      %p196 = scmp.lt.s32.totalorder %s19, 1
      %s197 = scalar_select %p196, %s19, 1
      %p198 = scmp.lt.s32.totalorder %s18, 0
      %s199 = scalar_select %p198, %s18, 0
      %s200 = sadd.s32 %s199, %s197
      %s201 = smul.addr %s200, 8
      %s202 = scalar_lea.vmem %s0, %s201
      %p203 = scmp.lt.s32.totalorder %s18, 0
      %s204 = scalar_select %p203, %s18, 0
      %s205 = smul.addr %s204, 8
      %s206 = scalar_lea.vmem %s2, %s205
      %p207 = scmp.lt.s32.totalorder %s19, 1
      %s208 = scalar_select %p207, %s19, 1
      %p209 = scmp.lt.s32.totalorder %s18, 0
      %s210 = scalar_select %p209, %s18, 0
      %s211 = sadd.s32 %s210, %s208
      %s212 = smul.addr %s211, 8
      %s213 = scalar_lea.vmem %s3, %s212
      %v214 = vld [vmem:[%s202] sm:$0xff]
      %v215 = vld [vmem:[%s1] sm:$0xff]
      %v216 = vld [vmem:[%s1 + $0x8] sm:$0xff]
      %v217 = vld [vmem:[%s1 + $0x10] sm:$0xff]
      %v218 = vld [vmem:[%s1 + $0x18] sm:$0xff]
      %v219 = vld [vmem:[%s1 + $0x20] sm:$0xff]
      %v220 = vld [vmem:[%s1 + $0x28] sm:$0xff]
      %v221 = vld [vmem:[%s1 + $0x30] sm:$0xff]
      %v222 = vld [vmem:[%s1 + $0x38] sm:$0xff]
      %v223 = vld [vmem:[%s206] sm:$0xff]
      %vm224 = vcmask 523264
      %v226 = vsel %vm224, %v214, 0
      %228 = vmatprep.subr.mxu0 0.0
      %229 = vmatpush1.msra.mxu0 %v215
      %230 = vmatprep.subr.mxu0 0.0
      %231 = vmatpush1.msra.mxu0 %v216
      %232 = vmatprep.subr.mxu0 0.0
      %233 = vmatpush1.msra.mxu0 %v217
      %234 = vmatprep.subr.mxu0 0.0
      %235 = vmatpush1.msra.mxu0 %v218
      %236 = vmatprep.subr.mxu0 0.0
      %237 = vmatpush1.msra.mxu0 %v219
      %238 = vmatprep.subr.mxu0 0.0
      %239 = vmatpush1.msra.mxu0 %v220
      %240 = vmatprep.subr.mxu0 0.0
      %241 = vmatpush1.msra.mxu0 %v221
      %242 = vmatprep.subr.mxu0 0.0
      %243 = vmatpush1.msra.mxu0 %v222
      %244 = vmatprep.subr.mxu0 0.0
      %245 = vmatpush1.msra.mxu0 0.0
      %246 = vmatprep.subr.mxu0 0.0
      %247 = vmatpush1.msra.mxu0 0.0
      %248 = vmatprep.subr.mxu0 0.0
      %249 = vmatpush1.msra.mxu0 0.0
      %250 = vmatprep.subr.mxu0 0.0
      %251 = vmatpush1.msra.mxu0 0.0
      %252 = vmatprep.subr.mxu0 0.0
      %253 = vmatpush1.msra.mxu0 0.0
      %254 = vmatprep.subr.mxu0 0.0
      %255 = vmatpush1.msra.mxu0 0.0
      %256 = vmatprep.subr.mxu0 0.0
      %257 = vmatpush1.msra.mxu0 0.0
      %258 = vmatprep.subr.mxu0 0.0
      %259 = vmatpush1.msra.mxu0 0.0
      %260 = vmatprep.subr.mxu0 0.0
      %261 = vmatpush1.msra.mxu0 0.0
      %262 = vmatprep.subr.mxu0 0.0
      %263 = vmatpush1.msra.mxu0 0.0
      %264 = vmatprep.subr.mxu0 0.0
      %265 = vmatpush1.msra.mxu0 0.0
      %266 = vmatprep.subr.mxu0 0.0
      %267 = vmatpush1.msra.mxu0 0.0
      %268 = vmatprep.subr.mxu0 0.0
      %269 = vmatpush1.msra.mxu0 0.0
      %270 = vmatprep.subr.mxu0 0.0
      %271 = vmatpush1.msra.mxu0 0.0
      %272 = vmatprep.subr.mxu0 0.0
      %273 = vmatpush1.msra.mxu0 0.0
      %274 = vmatprep.subr.mxu0 0.0
      %275 = vmatpush1.msra.mxu0 0.0
      %276 = vmatprep.subr.mxu0 0.0
      %277 = vmatpush1.msra.mxu0 0.0
      %278 = vmatprep.subr.mxu0 0.0
      %279 = vmatpush1.msra.mxu0 0.0
      %280 = vmatprep.subr.mxu0 0.0
      %281 = vmatpush1.msra.mxu0 0.0
      %282 = vmatprep.subr.mxu0 0.0
      %283 = vmatpush1.msra.mxu0 0.0
      %284 = vmatprep.subr.mxu0 0.0
      %285 = vmatpush1.msra.mxu0 0.0
      %286 = vmatprep.subr.mxu0 0.0
      %287 = vmatpush1.msra.mxu0 0.0
      %288 = vmatprep.subr.mxu0 0.0
      %289 = vmatpush1.msra.mxu0 0.0
      %290 = vmatprep.subr.mxu0 0.0
      %291 = vmatpush1.msra.mxu0 0.0
      %292 = vmatprep.mubr.f32.mxu0 0.0
      %293 = vmatmul.mubr.f32.gmra.mrb[0].mxu0 %v226
      %v294 = vpop.f32.mrb[0].mxu0
      %v295 = vadd.f32 %v223, %v294
      %v296 = vpop.f32.mrb[0].mxu0
      %297 = vdwg.mxu0
      %298 = vst [vmem:[%s213] sm:$0xff] %v295
      %p299 = scmp.lt.s32.totalorder %s19, 1
      %s300 = scalar_select %p299, %s19, 1
      %p301 = scmp.lt.s32.totalorder %s18, 0
      %s302 = scalar_select %p301, %s18, 0
      %s303 = sadd.s32 %s302, %s300
      %s304 = smul.addr %s303, 8
      %s305 = scalar_lea.vmem %s3, %s304
      // Predicated region
      $region33: #{data_embedding.1} parent=31 // pred_check
        %p306 = pneg %p121
      $region34: #{data_embedding.1} parent=31 // pred_check_branch
        %308 = sbr.rel (%p306) target = $region36
      $region35: #{data_embedding.1} parent=31 // pred_region
        _
      $region36: #{data_embedding.1} parent=31 // pred_fallthru
        _
    $region32: #{data_embedding.1} parent=5 // pred_fallthru
      _
    %p309 = scmp.le.s32.totalorder 2, %s9
    // Predicated region
    $region37: #{data_embedding.1} parent=5 // pred_check
      %p310 = pneg %p309
    $region38: #{data_embedding.1} parent=5 // pred_check_branch
      %312 = sbr.rel (%p310) target = $region40
    $region39: #{data_embedding.1} parent=5 // pred_region
      %s313 = ssub.s32 %s9, 2
      // Predicated region
      $region41: #{data_embedding.1} parent=39 // pred_check
        %p314 = pneg %p127
      $region42: #{data_embedding.1} parent=39 // pred_check_branch
        %316 = sbr.rel (%p314) target = $region44
      $region43: #{data_embedding.1} parent=39 // pred_region
        %p317 = scmp.lt.s32.totalorder %s21, 1
        %s318 = scalar_select %p317, %s21, 1
        %p319 = scmp.lt.s32.totalorder %s20, 0
        %s320 = scalar_select %p319, %s20, 0
        %s321 = sadd.s32 %s320, %s318
        %s322 = smul.addr %s321, 8
        %s323 = scalar_lea.vmem %s3, %s322
      $region44: #{data_embedding.1} parent=39 // pred_fallthru
        _
    $region40: #{data_embedding.1} parent=5 // pred_fallthru
      _
  $region6: #{data_embedding.1} parent=0 // loop_footer
    %s13 = sadd.s32 1, %s9
  $region7: #{data_embedding.1} parent=0 // loop_footer_branch
    %8 = sbr.rel target = $region3
  $region8: #{data_embedding.1} parent=0 // loop_exit
    _

</llo_original>
